<compile_context>
chip_gen: v6e
topology: v6e:2x2x1
jax: 0.10.0
libtpu: 0.0.40
codegen_flags: <defaults>
</compile_context>

<pallas_src>
import functools

import jax
import jax.numpy as jnp
from jax.experimental import pallas as pl
from jax.experimental.pallas import tpu as pltpu


def _round_up(v, m):
    return (v + m - 1) // m * m


def _cdiv(a, b):
    return (a + b - 1) // b


def _simloss_kernel(n_ref, x_ref, y_ref, w_ref, out_ref, *, epsilon, tile_n):
    # n_ref:   SMEM (1,)            true batch size (scalar prefetch)
    # x_ref:   VMEM (TILE_N, C)     tile of probabilities
    # y_ref:   VMEM (TILE_N, 1)     int32 labels for this tile
    # w_ref:   VMEM (C, C)          full similarity matrix (constant block index -> resident)
    # out_ref: VMEM (1, 8, 128)     per-tile partial sum at [0, 0, 0], zeros elsewhere
    i = pl.program_id(0)
    n_total = n_ref[0]

    x = x_ref[...].astype(jnp.float32)                        # (TILE_N, C)
    labels = y_ref[...]                                       # (TILE_N, 1) int32
    c = x.shape[1]

    # One-hot selection of the gathered w rows, built on the VPU.
    class_ids = jax.lax.broadcasted_iota(jnp.int32, (tile_n, c), 1)
    onehot = (class_ids == labels).astype(jnp.float32)        # (TILE_N, C)

    # w_rows[j, :] == w[y[j], :]  via one MXU matmul per tile.
    # HIGHEST precision keeps the selected f32 values (one-hot rows pick exact w entries).
    w_rows = jnp.dot(
        onehot,
        w_ref[...].astype(jnp.float32),
        preferred_element_type=jnp.float32,
        precision=jax.lax.Precision.HIGHEST,
    )                                                         # (TILE_N, C)

    # Validity mask for the ragged last tile (inputs past N are garbage, not padded).
    row_ids = i * tile_n + jax.lax.broadcasted_iota(jnp.int32, (tile_n, 1), 0)
    valid = row_ids < n_total                                 # (TILE_N, 1)

    # Weighted sum over the class (lane) dimension, guard garbage rows before the log.
    s = jnp.sum(w_rows * x, axis=1, keepdims=True)            # (TILE_N, 1)
    s = jnp.where(valid, s, jnp.float32(1.0))
    per_row = jnp.where(valid, -jnp.log(s + epsilon), jnp.float32(0.0))

    # Per-tile partial sum (XLU reduction), stored into a lane/sublane-aligned slab.
    partial = jnp.sum(per_row)                                # scalar
    sub = jax.lax.broadcasted_iota(jnp.int32, (1, 8, 128), 1)
    lane = jax.lax.broadcasted_iota(jnp.int32, (1, 8, 128), 2)
    out_ref[...] = jnp.where((sub == 0) & (lane == 0), partial, jnp.float32(0.0))


def sim_loss(x, y, w, epsilon=1e-8, tile_n=2048):
    """x: (N, C) float, y: (N,) int, w: (C, C) float -> scalar mean SimCE loss."""
    n, c = x.shape
    assert w.shape == (c, c)
    y2 = y.astype(jnp.int32).reshape(n, 1)

    # Tile selection: multiple of 8, no larger than the (rounded-up) batch.
    tile_n = int(min(int(tile_n), _round_up(n, 8)))
    if n > tile_n:
        # Keep >= 2 (balanced) tiles so v7x's two TensorCores can split the batch.
        tile_n = min(tile_n, _round_up(_cdiv(n, 2), 8))
    tile_n = max(8, _round_up(tile_n, 8))
    num_tiles = _cdiv(n, tile_n)

    n_arr = jnp.array([n], dtype=jnp.int32)

    kernel = functools.partial(
        _simloss_kernel, epsilon=float(epsilon), tile_n=tile_n
    )

    cost = pl.CostEstimate(
        flops=2 * n * c * c + 2 * n * c,
        transcendentals=n,
        bytes_accessed=4 * (n * c + n + c * c + num_tiles * 8 * 128),
    )

    partials = pl.pallas_call(
        kernel,
        out_shape=jax.ShapeDtypeStruct((num_tiles, 8, 128), jnp.float32),
        grid_spec=pltpu.PrefetchScalarGridSpec(
            num_scalar_prefetch=1,           # n_arr -> SMEM, passed to kernel + index_maps
            grid=(num_tiles,),
            in_specs=[
                # x tile i (ragged last tile handled by the in-kernel mask)
                pl.BlockSpec((tile_n, c), lambda i, n_ref: (i, 0)),
                # labels tile i
                pl.BlockSpec((tile_n, 1), lambda i, n_ref: (i, 0)),
                # full w, constant block index -> stays resident in VMEM
                pl.BlockSpec((c, c), lambda i, n_ref: (0, 0)),
            ],
            out_specs=pl.BlockSpec((1, 8, 128), lambda i, n_ref: (i, 0, 0)),
        ),
        compiler_params=pltpu.CompilerParams(
            dimension_semantics=("parallel",),
        ),
        cost_estimate=cost,
    )(n_arr, x, y2, w)

    # Each tile contributed exactly one nonzero element; sum everything / true N.
    return jnp.sum(partials) / jnp.float32(n)


def sim_loss_ref(x, y, w, epsilon=1e-8):
    w_y = w[y, :]
    return jnp.mean(-jnp.log(jnp.sum(w_y * x, axis=1) + epsilon))


if __name__ == "__main__":
    num_classes = 80   # default number_of_classes in the module
    batch = 8

    key = jax.random.PRNGKey(0)
    k_w, k_x, k_y = jax.random.split(key, 3)

    # Deterministic synthetic parameters:
    # w: class-similarity matrix, values in (0, 1], diagonal = 1 (identity-like).
    w_raw = jax.random.uniform(k_w, (num_classes, num_classes),
                               dtype=jnp.float32, minval=0.5, maxval=1.0)
    w = w_raw.at[jnp.arange(num_classes), jnp.arange(num_classes)].set(1.0)

    # x: softmax-like probabilities over classes, y: integer labels.
    logits = jax.random.normal(k_x, (batch, num_classes), dtype=jnp.float32)
    x = jax.nn.softmax(logits, axis=1)
    y = jax.random.randint(k_y, (batch,), 0, num_classes, dtype=jnp.int32)

    loss = jax.block_until_ready(sim_loss(x, y, w, epsilon=1e-8))
    loss_ref = jax.block_until_ready(sim_loss_ref(x, y, w, epsilon=1e-8))

    assert jnp.allclose(loss, loss_ref, rtol=1e-5, atol=1e-6), (loss, loss_ref)
    print("KERNEL_OK")
</pallas_src>

<mosaic_0001>
module attributes {stable_mosaic.version = 11 : i64} {
  func.func @_simloss_kernel(%arg0: i32, %arg1: memref<1xi32, #tpu.memory_space<smem>>, %arg2: memref<8x80xf32, #tpu.memory_space<vmem>>, %arg3: memref<8x1xi32, #tpu.memory_space<vmem>>, %arg4: memref<80x80xf32, #tpu.memory_space<vmem>>, %arg5: memref<1x8x128xf32, #tpu.memory_space<vmem>>) attributes {dimension_semantics = [#tpu.dimension_semantics<parallel>], iteration_bounds = array<i64: 1>, scalar_prefetch = 1 : i64, scratch_operands = 0 : i64, tpu.core_type = #tpu.core_type<tc>, window_params = [{transform_indices = @transform_0, window_bounds = array<i64: 8, 80>}, {transform_indices = @transform_1, window_bounds = array<i64: 8, 1>}, {pipeline_mode = #tpu.pipeline_mode<synchronous>, transform_indices = @transform_2, window_bounds = array<i64: 80, 80>}, {transform_indices = @transform_3, window_bounds = array<i64: 1, 8, 128>}]} {
    %c0 = arith.constant 0 : index
    %0 = memref.load %arg1[%c0] : memref<1xi32, #tpu.memory_space<smem>>
    %c0_0 = arith.constant 0 : index
    %c0_1 = arith.constant 0 : index
    %1 = vector.load %arg2[%c0_0, %c0_1] : memref<8x80xf32, #tpu.memory_space<vmem>>, vector<8x80xf32>
    %c0_2 = arith.constant 0 : index
    %c0_3 = arith.constant 0 : index
    %2 = vector.load %arg3[%c0_2, %c0_3] : memref<8x1xi32, #tpu.memory_space<vmem>>, vector<8x1xi32>
    %3 = tpu.iota {dimensions = array<i32: 1>} : vector<8x80xi32>
    %4 = vector.broadcast %2 : vector<8x1xi32> to vector<8x80xi32>
    %5 = arith.cmpi eq, %3, %4 : vector<8x80xi32>
    %6 = arith.extui %5 : vector<8x80xi1> to vector<8x80xi32>
    %7 = arith.sitofp %6 : vector<8x80xi32> to vector<8x80xf32>
    %c0_4 = arith.constant 0 : index
    %c0_5 = arith.constant 0 : index
    %8 = vector.load %arg4[%c0_4, %c0_5] : memref<80x80xf32, #tpu.memory_space<vmem>>, vector<80x80xf32>
    %cst = arith.constant dense<0.000000e+00> : vector<8x80xf32>
    %9 = tpu.matmul %7, %8, %cst {dimension_numbers = #tpu.dot_dimension_numbers<[1], [0], [0], [1], [0, 0, 1, 1], [], []>, precision = #tpu.contract_precision<fp32>} : vector<8x80xf32>, vector<80x80xf32>, vector<8x80xf32> -> vector<8x80xf32>
    %c8_i32 = arith.constant 8 : i32
    %10 = arith.muli %arg0, %c8_i32 : i32
    %11 = tpu.iota {dimensions = array<i32: 0>} : vector<8x1xi32>
    %12 = vector.broadcast %10 : i32 to vector<8x1xi32>
    %13 = arith.addi %12, %11 : vector<8x1xi32>
    %14 = vector.broadcast %0 : i32 to vector<8x1xi32>
    %15 = arith.cmpi slt, %13, %14 : vector<8x1xi32>
    %16 = arith.mulf %9, %1 : vector<8x80xf32>
    %cst_6 = arith.constant dense<0.000000e+00> : vector<8xf32>
    %17 = vector.multi_reduction <add>, %16, %cst_6 [1] : vector<8x80xf32> to vector<8xf32>
    %18 = vector.shape_cast %17 : vector<8xf32> to vector<8x1xf32>
    %cst_7 = arith.constant 1.000000e+00 : f32
    %19 = vector.broadcast %cst_7 : f32 to vector<8x1xf32>
    %20 = arith.select %15, %18, %19 : vector<8x1xi1>, vector<8x1xf32>
    %cst_8 = arith.constant 9.99999993E-9 : f32
    %21 = vector.broadcast %cst_8 : f32 to vector<8x1xf32>
    %22 = arith.addf %20, %21 : vector<8x1xf32>
    %23 = math.log %22 : vector<8x1xf32>
    %cst_9 = arith.constant 0.000000e+00 : f32
    %24 = vector.broadcast %cst_9 : f32 to vector<8x1xf32>
    %25 = arith.subf %24, %23 : vector<8x1xf32>
    %cst_10 = arith.constant 0.000000e+00 : f32
    %26 = vector.broadcast %cst_10 : f32 to vector<8x1xf32>
    %27 = arith.select %15, %25, %26 : vector<8x1xi1>, vector<8x1xf32>
    %28 = vector.shape_cast %27 : vector<8x1xf32> to vector<1x8x1xf32>
    %cst_11 = arith.constant dense<0.000000e+00> : vector<1xf32>
    %29 = vector.multi_reduction <add>, %28, %cst_11 [1, 2] : vector<1x8x1xf32> to vector<1xf32>
    %30 = vector.shape_cast %29 : vector<1xf32> to vector<1x1x1xf32>
    %31 = vector.extract %30[0, 0, 0] : f32 from vector<1x1x1xf32>
    %32 = tpu.iota {dimensions = array<i32: 1>} : vector<1x8x128xi32>
    %33 = tpu.iota {dimensions = array<i32: 2>} : vector<1x8x128xi32>
    %c0_i32 = arith.constant 0 : i32
    %34 = vector.broadcast %c0_i32 : i32 to vector<1x8x128xi32>
    %35 = arith.cmpi eq, %32, %34 : vector<1x8x128xi32>
    %c0_i32_12 = arith.constant 0 : i32
    %36 = vector.broadcast %c0_i32_12 : i32 to vector<1x8x128xi32>
    %37 = arith.cmpi eq, %33, %36 : vector<1x8x128xi32>
    %38 = arith.andi %35, %37 : vector<1x8x128xi1>
    %cst_13 = arith.constant 0.000000e+00 : f32
    %39 = vector.broadcast %31 : f32 to vector<1x8x128xf32>
    %40 = vector.broadcast %cst_13 : f32 to vector<1x8x128xf32>
    %41 = arith.select %38, %39, %40 : vector<1x8x128xi1>, vector<1x8x128xf32>
    %c0_14 = arith.constant 0 : index
    %c0_15 = arith.constant 0 : index
    %c0_16 = arith.constant 0 : index
    %42 = vector.load %arg5[%c0_14, %c0_15, %c0_16] : memref<1x8x128xf32, #tpu.memory_space<vmem>>, vector<1x8x128xf32>
    tpu.vector_store %arg5[%c0_14, %c0_15, %c0_16], %41 {strides = array<i32>} : memref<1x8x128xf32, #tpu.memory_space<vmem>>, vector<1x8x128xf32>,
    return
  }
  func.func @transform_0(%arg0: i32, %arg1: memref<1xi32, #tpu.memory_space<smem>>) -> (i32, i32) {
    %c0_i32 = arith.constant 0 : i32
    %c0_i32_0 = arith.constant 0 : i32
    return %arg0, %c0_i32 : i32, i32
  }
  func.func @transform_1(%arg0: i32, %arg1: memref<1xi32, #tpu.memory_space<smem>>) -> (i32, i32) {
    %c0_i32 = arith.constant 0 : i32
    %c0_i32_0 = arith.constant 0 : i32
    return %arg0, %c0_i32 : i32, i32
  }
  func.func @transform_2(%arg0: i32, %arg1: memref<1xi32, #tpu.memory_space<smem>>) -> (i32, i32) {
    %c0_i32 = arith.constant 0 : i32
    %c0_i32_0 = arith.constant 0 : i32
    %c0_i32_1 = arith.constant 0 : i32
    return %c0_i32, %c0_i32_0 : i32, i32
  }
  func.func @transform_3(%arg0: i32, %arg1: memref<1xi32, #tpu.memory_space<smem>>) -> (i32, i32, i32) {
    %c0_i32 = arith.constant 0 : i32
    %c0_i32_0 = arith.constant 0 : i32
    %c0_i32_1 = arith.constant 0 : i32
    return %arg0, %c0_i32, %c0_i32_0 : i32, i32, i32
  }
}

</mosaic_0001>

<llo_original>
// kernel: tpu_custom_call.1
$region0: #{tpu_custom_call.1}
  #allocation0 [shape = 'u32[]', space=smem, size = 0x4, offset = 0x4, fixed_abs, tag = 'smem constant byte address 0x4 - core index']
  #allocation1 [shape = 'u32[144,128]{1,0:T(1,128)}', space=vmem, size = 0x12000, scoped, tag = 'internal scratch']
  #allocation2 [shape = 's32[1]{0}', space=sflag, size = 0x4, scoped, tag = 'scoped memory for tpu_custom_call.1']
  #allocation3 [shape = 's32[1]{0:T(128)S(6)}', space=smem, size = 0x200, scoped, tag = 'prefetched SMEM operand 0']
  %s0 = inlined_call_operand.<no memory space> [shape: s32[1], index: 0, kind: input, shape index: {}]
  %s1 = inlined_call_operand.vmem [shape: f32[8,80], index: 1, kind: input, shape index: {}]
  %s2 = inlined_call_operand.vmem [shape: s32[8,1], index: 2, kind: input, shape index: {}]
  %s3 = inlined_call_operand.hbm [shape: f32[80,80], index: 3, kind: input, shape index: {}]
  %s4 = inlined_call_operand.hbm [shape: f32[1,8,128], index: 4, kind: output, shape index: {}]
  %s5 = sld [smem:[#allocation0]]
  $region26: #{tpu_custom_call.1} parent=0
    _
  %s7 = ssub.s32 1, %s5
  %s8 = scalar_select 0, %s7, %s5
  %9 = sst [smem:[#allocation3]] %s0
  $region1: #{tpu_custom_call.1} parent=0
    #allocation4 [shape = 'u8[40960]{0}', space=vmem, size = 0xa000, scoped, tag = 'input window, operand 3, single buffered']
    #allocation5 [shape = 's32[1]{0}', space=sflag, size = 0x4, scoped, tag = 'scoped memory for tpu_custom_call.1']
    #allocation6 [shape = 's32[1]{0}', space=sflag, size = 0x4, scoped, tag = 'scoped memory for tpu_custom_call.1']
    #allocation7 [shape = 'u8[4096]{0}', space=vmem, size = 0x1000, scoped, tag = 'output window, operand 0, single buffered']
    %10 = vsyncpa [#allocation5], 0
    %11 = vsyncpa [#allocation6], 0
    // Predicated region
    $region2: #{tpu_custom_call.1} parent=1 // pred_check
      _
    $region3: #{tpu_custom_call.1} parent=1 // pred_check_branch
      %13 = sbr.rel (0) target = $region5
    $region4: #{tpu_custom_call.1} parent=1 // pred_region
      _
    $region5: #{tpu_custom_call.1} parent=1 // pred_fallthru
      _
    // Predicated region
    $region6: #{tpu_custom_call.1} parent=1 // pred_check
      _
    $region7: #{tpu_custom_call.1} parent=1 // pred_check_branch
      %15 = sbr.rel (0) target = $region9
    $region8: #{tpu_custom_call.1} parent=1 // pred_region
      _
    $region9: #{tpu_custom_call.1} parent=1 // pred_fallthru
      _
    // Predicated region
    $region10: #{tpu_custom_call.1} parent=1 // pred_check
      _
    $region11: #{tpu_custom_call.1} parent=1 // pred_check_branch
      %17 = sbr.rel (0) target = $region13
    $region12: #{tpu_custom_call.1} parent=1 // pred_region
      %s19 = ssub.s32 1280, 1280
      %20 = vsyncadd [#allocation5], %s19
      %s21 = sshll.u32 [#allocation4], 4
      %s22 = int_to_ptr.vmem [resolvable:$true] %s21
      %27 = dma.hbm_to_vmem [thread:$0]  %s3, 1280, %s22, [#allocation5], 128, 128, 8
    $region13: #{tpu_custom_call.1} parent=1 // pred_fallthru
      _
    // Predicated region
    $region14: #{tpu_custom_call.1} parent=1 // pred_check
      _
    $region15: #{tpu_custom_call.1} parent=1 // pred_check_branch
      %29 = sbr.rel (0) target = $region17
    $region16: #{tpu_custom_call.1} parent=1 // pred_region
      %30 = dma.done [#allocation5], 1280
    $region17: #{tpu_custom_call.1} parent=1 // pred_fallthru
      _
    %s31 = sld [smem:[#allocation3]]
    %v32 = vld [vmem:[%s1] sm:$0xff]
    %v33 = vld [vmem:[%s2] sm:$0xff]
    %v34 = vlaneseq
    %v35 = vand.u32 %v34, 127
    %36 = vset.pattern.permute.xlu0 0
    %37 = vperm.xlu0 %36, %v33
    %v38 = vpop.permute.xlu0 %37
    %vm39 = vcmp.eq.s32.totalorder %v35, %v38
    %v40 = vsel %vm39, 1, 0
    %v41 = vcvt.s32.f32 %v40
    %v42 = vld [vmem:[#allocation4] sm:$0xff]
    %v43 = vld [vmem:[#allocation4 + $0x8] sm:$0xff]
    %v44 = vld [vmem:[#allocation4 + $0x10] sm:$0xff]
    %v45 = vld [vmem:[#allocation4 + $0x18] sm:$0xff]
    %v46 = vld [vmem:[#allocation4 + $0x20] sm:$0xff]
    %v47 = vld [vmem:[#allocation4 + $0x28] sm:$0xff]
    %v48 = vld [vmem:[#allocation4 + $0x30] sm:$0xff]
    %v49 = vld [vmem:[#allocation4 + $0x38] sm:$0xff]
    %v50 = vld [vmem:[#allocation4 + $0x40] sm:$0xff]
    %v51 = vld [vmem:[#allocation4 + $0x48] sm:$0xff]
    %vm52 = vcmask 654336
    %v54 = vsel %vm52, %v41, 0
    %56 = vmatprep.subr.mxu0 0.0
    %57 = vmatpush1.msra.mxu0 0.0
    %58 = vmatprep.subr.mxu0 0.0
    %59 = vmatpush1.msra.mxu0 0.0
    %60 = vmatprep.subr.mxu0 0.0
    %61 = vmatpush1.msra.mxu0 0.0
    %62 = vmatprep.subr.mxu0 0.0
    %63 = vmatpush1.msra.mxu0 0.0
    %64 = vmatprep.subr.mxu0 0.0
    %65 = vmatpush1.msra.mxu0 0.0
    %66 = vmatprep.subr.mxu0 0.0
    %67 = vmatpush1.msra.mxu0 0.0
    %68 = vmatprep.subr.mxu0 0.0
    %v69 = vand.u32 %v51, 4294901760
    %70 = vmatpush1.msra.mxu0 %v69
    %71 = vmatprep.subr.mxu0 0.0
    %v72 = vand.u32 %v50, 4294901760
    %73 = vmatpush1.msra.mxu0 %v72
    %74 = vmatprep.subr.mxu0 0.0
    %v75 = vand.u32 %v49, 4294901760
    %76 = vmatpush1.msra.mxu0 %v75
    %77 = vmatprep.subr.mxu0 0.0
    %v78 = vand.u32 %v48, 4294901760
    %79 = vmatpush1.msra.mxu0 %v78
    %80 = vmatprep.subr.mxu0 0.0
    %v81 = vand.u32 %v47, 4294901760
    %82 = vmatpush1.msra.mxu0 %v81
    %83 = vmatprep.subr.mxu0 0.0
    %v84 = vand.u32 %v46, 4294901760
    %85 = vmatpush1.msra.mxu0 %v84
    %86 = vmatprep.subr.mxu0 0.0
    %v87 = vand.u32 %v45, 4294901760
    %88 = vmatpush1.msra.mxu0 %v87
    %89 = vmatprep.subr.mxu0 0.0
    %v90 = vand.u32 %v44, 4294901760
    %91 = vmatpush1.msra.mxu0 %v90
    %92 = vmatprep.subr.mxu0 0.0
    %v93 = vand.u32 %v43, 4294901760
    %94 = vmatpush1.msra.mxu0 %v93
    %95 = vmatprep.subr.mxu0 0.0
    %v96 = vand.u32 %v42, 4294901760
    %97 = vmatpush1.msra.mxu0 %v96
    %98 = vmatprep.subr.mxu0 0.0
    %99 = vmatpush2.msra.mxu0 0.0
    %100 = vmatprep.subr.mxu0 0.0
    %101 = vmatpush2.msra.mxu0 0.0
    %102 = vmatprep.subr.mxu0 0.0
    %103 = vmatpush2.msra.mxu0 0.0
    %104 = vmatprep.subr.mxu0 0.0
    %105 = vmatpush2.msra.mxu0 0.0
    %106 = vmatprep.subr.mxu0 0.0
    %107 = vmatpush2.msra.mxu0 0.0
    %108 = vmatprep.subr.mxu0 0.0
    %109 = vmatpush2.msra.mxu0 0.0
    %110 = vmatprep.subr.mxu0 0.0
    %111 = vmatpush2.msra.mxu0 0.0
    %112 = vmatprep.subr.mxu0 0.0
    %113 = vmatpush2.msra.mxu0 0.0
    %114 = vmatprep.subr.mxu0 0.0
    %115 = vmatpush2.msra.mxu0 0.0
    %116 = vmatprep.subr.mxu0 0.0
    %117 = vmatpush2.msra.mxu0 0.0
    %118 = vmatprep.subr.mxu0 0.0
    %119 = vmatpush2.msra.mxu0 0.0
    %120 = vmatprep.subr.mxu0 0.0
    %121 = vmatpush2.msra.mxu0 0.0
    %122 = vmatprep.subr.mxu0 0.0
    %123 = vmatpush2.msra.mxu0 0.0
    %124 = vmatprep.subr.mxu0 0.0
    %125 = vmatpush2.msra.mxu0 0.0
    %126 = vmatprep.subr.mxu0 0.0
    %127 = vmatpush2.msra.mxu0 0.0
    %128 = vmatprep.subr.mxu0 0.0
    %129 = vmatpush2.msra.mxu0 0.0
    %130 = vmatprep.mubr.f32.mxu0 0.0
    %v131 = vand.u32 %v54, 4294901760
    %v132 = vsub.f32 %v54, %v131
    %v133 = vand.u32 %v132, 4294901760
    %v134 = vsub.f32 %v132, %v133
    %v135 = vand.u32 %v134, 4294901760
    %136 = vmatmul.mubr.f32.gmra.mxu0 %v135
    %v137 = vpop.f32.mrf.mxu0
    %v138 = vadd.f32 0.0, %v137
    %v139 = vpop.f32.mrf.mxu0
    %140 = vdwg.mxu0
    %141 = vmatprep.subr.mxu0 0.0
    %142 = vmatpush1.msra.mxu0 0.0
    %143 = vmatprep.subr.mxu0 0.0
    %144 = vmatpush1.msra.mxu0 0.0
    %145 = vmatprep.subr.mxu0 0.0
    %146 = vmatpush1.msra.mxu0 0.0
    %147 = vmatprep.subr.mxu0 0.0
    %148 = vmatpush1.msra.mxu0 0.0
    %149 = vmatprep.subr.mxu0 0.0
    %150 = vmatpush1.msra.mxu0 0.0
    %151 = vmatprep.subr.mxu0 0.0
    %152 = vmatpush1.msra.mxu0 0.0
    %153 = vmatprep.subr.mxu0 0.0
    %v154 = vand.u32 %v51, 4294901760
    %v155 = vsub.f32 %v51, %v154
    %v156 = vand.u32 %v155, 4294901760
    %v157 = vsub.f32 %v155, %v156
    %v158 = vand.u32 %v157, 4294901760
    %159 = vmatpush1.msra.mxu0 %v158
    %160 = vmatprep.subr.mxu0 0.0
    %v161 = vand.u32 %v50, 4294901760
    %v162 = vsub.f32 %v50, %v161
    %v163 = vand.u32 %v162, 4294901760
    %v164 = vsub.f32 %v162, %v163
    %v165 = vand.u32 %v164, 4294901760
    %166 = vmatpush1.msra.mxu0 %v165
    %167 = vmatprep.subr.mxu0 0.0
    %v168 = vand.u32 %v49, 4294901760
    %v169 = vsub.f32 %v49, %v168
    %v170 = vand.u32 %v169, 4294901760
    %v171 = vsub.f32 %v169, %v170
    %v172 = vand.u32 %v171, 4294901760
    %173 = vmatpush1.msra.mxu0 %v172
    %174 = vmatprep.subr.mxu0 0.0
    %v175 = vand.u32 %v48, 4294901760
    %v176 = vsub.f32 %v48, %v175
    %v177 = vand.u32 %v176, 4294901760
    %v178 = vsub.f32 %v176, %v177
    %v179 = vand.u32 %v178, 4294901760
    %180 = vmatpush1.msra.mxu0 %v179
    %181 = vmatprep.subr.mxu0 0.0
    %v182 = vand.u32 %v47, 4294901760
    %v183 = vsub.f32 %v47, %v182
    %v184 = vand.u32 %v183, 4294901760
    %v185 = vsub.f32 %v183, %v184
    %v186 = vand.u32 %v185, 4294901760
    %187 = vmatpush1.msra.mxu0 %v186
    %188 = vmatprep.subr.mxu0 0.0
    %v189 = vand.u32 %v46, 4294901760
    %v190 = vsub.f32 %v46, %v189
    %v191 = vand.u32 %v190, 4294901760
    %v192 = vsub.f32 %v190, %v191
    %v193 = vand.u32 %v192, 4294901760
    %194 = vmatpush1.msra.mxu0 %v193
    %195 = vmatprep.subr.mxu0 0.0
    %v196 = vand.u32 %v45, 4294901760
    %v197 = vsub.f32 %v45, %v196
    %v198 = vand.u32 %v197, 4294901760
    %v199 = vsub.f32 %v197, %v198
    %v200 = vand.u32 %v199, 4294901760
    %201 = vmatpush1.msra.mxu0 %v200
    %202 = vmatprep.subr.mxu0 0.0
    %v203 = vand.u32 %v44, 4294901760
    %v204 = vsub.f32 %v44, %v203
    %v205 = vand.u32 %v204, 4294901760
    %v206 = vsub.f32 %v204, %v205
    %v207 = vand.u32 %v206, 4294901760
    %208 = vmatpush1.msra.mxu0 %v207
    %209 = vmatprep.subr.mxu0 0.0
    %v210 = vand.u32 %v43, 4294901760
    %v211 = vsub.f32 %v43, %v210
    %v212 = vand.u32 %v211, 4294901760
    %v213 = vsub.f32 %v211, %v212
    %v214 = vand.u32 %v213, 4294901760
    %215 = vmatpush1.msra.mxu0 %v214
    %216 = vmatprep.subr.mxu0 0.0
    %v217 = vand.u32 %v42, 4294901760
    %v218 = vsub.f32 %v42, %v217
    %v219 = vand.u32 %v218, 4294901760
    %v220 = vsub.f32 %v218, %v219
    %v221 = vand.u32 %v220, 4294901760
    %222 = vmatpush1.msra.mxu0 %v221
    %223 = vmatprep.subr.mxu0 0.0
    %224 = vmatpush2.msra.mxu0 0.0
    %225 = vmatprep.subr.mxu0 0.0
    %226 = vmatpush2.msra.mxu0 0.0
    %227 = vmatprep.subr.mxu0 0.0
    %228 = vmatpush2.msra.mxu0 0.0
    %229 = vmatprep.subr.mxu0 0.0
    %230 = vmatpush2.msra.mxu0 0.0
    %231 = vmatprep.subr.mxu0 0.0
    %232 = vmatpush2.msra.mxu0 0.0
    %233 = vmatprep.subr.mxu0 0.0
    %234 = vmatpush2.msra.mxu0 0.0
    %235 = vmatprep.subr.mxu0 0.0
    %236 = vmatpush2.msra.mxu0 0.0
    %237 = vmatprep.subr.mxu0 0.0
    %238 = vmatpush2.msra.mxu0 0.0
    %239 = vmatprep.subr.mxu0 0.0
    %240 = vmatpush2.msra.mxu0 0.0
    %241 = vmatprep.subr.mxu0 0.0
    %242 = vmatpush2.msra.mxu0 0.0
    %243 = vmatprep.subr.mxu0 0.0
    %244 = vmatpush2.msra.mxu0 0.0
    %245 = vmatprep.subr.mxu0 0.0
    %246 = vmatpush2.msra.mxu0 0.0
    %247 = vmatprep.subr.mxu0 0.0
    %248 = vmatpush2.msra.mxu0 0.0
    %249 = vmatprep.subr.mxu0 0.0
    %250 = vmatpush2.msra.mxu0 0.0
    %251 = vmatprep.subr.mxu0 0.0
    %252 = vmatpush2.msra.mxu0 0.0
    %253 = vmatprep.subr.mxu0 0.0
    %254 = vmatpush2.msra.mxu0 0.0
    %255 = vmatprep.mubr.f32.mxu0 0.0
    %v256 = vand.u32 %v54, 4294901760
    %257 = vmatmul.mubr.f32.gmra.mxu0 %v256
    %v258 = vpop.f32.mrf.mxu0
    %v259 = vadd.f32 %v138, %v258
    %v260 = vpop.f32.mrf.mxu0
    %261 = vdwg.mxu0
    %262 = vmatprep.subr.mxu0 0.0
    %263 = vmatpush1.msra.mxu0 0.0
    %264 = vmatprep.subr.mxu0 0.0
    %265 = vmatpush1.msra.mxu0 0.0
    %266 = vmatprep.subr.mxu0 0.0
    %267 = vmatpush1.msra.mxu0 0.0
    %268 = vmatprep.subr.mxu0 0.0
    %269 = vmatpush1.msra.mxu0 0.0
    %270 = vmatprep.subr.mxu0 0.0
    %271 = vmatpush1.msra.mxu0 0.0
    %272 = vmatprep.subr.mxu0 0.0
    %273 = vmatpush1.msra.mxu0 0.0
    %274 = vmatprep.subr.mxu0 0.0
    %v275 = vand.u32 %v51, 4294901760
    %v276 = vsub.f32 %v51, %v275
    %277 = vmatpush1.msra.mxu0 %v276
    %278 = vmatprep.subr.mxu0 0.0
    %v279 = vand.u32 %v50, 4294901760
    %v280 = vsub.f32 %v50, %v279
    %281 = vmatpush1.msra.mxu0 %v280
    %282 = vmatprep.subr.mxu0 0.0
    %v283 = vand.u32 %v49, 4294901760
    %v284 = vsub.f32 %v49, %v283
    %285 = vmatpush1.msra.mxu0 %v284
    %286 = vmatprep.subr.mxu0 0.0
    %v287 = vand.u32 %v48, 4294901760
    %v288 = vsub.f32 %v48, %v287
    %289 = vmatpush1.msra.mxu0 %v288
    %290 = vmatprep.subr.mxu0 0.0
    %v291 = vand.u32 %v47, 4294901760
    %v292 = vsub.f32 %v47, %v291
    %293 = vmatpush1.msra.mxu0 %v292
    %294 = vmatprep.subr.mxu0 0.0
    %v295 = vand.u32 %v46, 4294901760
    %v296 = vsub.f32 %v46, %v295
    %297 = vmatpush1.msra.mxu0 %v296
    %298 = vmatprep.subr.mxu0 0.0
    %v299 = vand.u32 %v45, 4294901760
    %v300 = vsub.f32 %v45, %v299
    %301 = vmatpush1.msra.mxu0 %v300
    %302 = vmatprep.subr.mxu0 0.0
    %v303 = vand.u32 %v44, 4294901760
    %v304 = vsub.f32 %v44, %v303
    %305 = vmatpush1.msra.mxu0 %v304
    %306 = vmatprep.subr.mxu0 0.0
    %v307 = vand.u32 %v43, 4294901760
    %v308 = vsub.f32 %v43, %v307
    %309 = vmatpush1.msra.mxu0 %v308
    %310 = vmatprep.subr.mxu0 0.0
    %v311 = vand.u32 %v42, 4294901760
    %v312 = vsub.f32 %v42, %v311
    %313 = vmatpush1.msra.mxu0 %v312
    %314 = vmatprep.subr.mxu0 0.0
    %315 = vmatpush2.msra.mxu0 0.0
    %316 = vmatprep.subr.mxu0 0.0
    %317 = vmatpush2.msra.mxu0 0.0
    %318 = vmatprep.subr.mxu0 0.0
    %319 = vmatpush2.msra.mxu0 0.0
    %320 = vmatprep.subr.mxu0 0.0
    %321 = vmatpush2.msra.mxu0 0.0
    %322 = vmatprep.subr.mxu0 0.0
    %323 = vmatpush2.msra.mxu0 0.0
    %324 = vmatprep.subr.mxu0 0.0
    %325 = vmatpush2.msra.mxu0 0.0
    %326 = vmatprep.subr.mxu0 0.0
    %327 = vmatpush2.msra.mxu0 0.0
    %328 = vmatprep.subr.mxu0 0.0
    %329 = vmatpush2.msra.mxu0 0.0
    %330 = vmatprep.subr.mxu0 0.0
    %331 = vmatpush2.msra.mxu0 0.0
    %332 = vmatprep.subr.mxu0 0.0
    %333 = vmatpush2.msra.mxu0 0.0
    %334 = vmatprep.subr.mxu0 0.0
    %335 = vmatpush2.msra.mxu0 0.0
    %336 = vmatprep.subr.mxu0 0.0
    %337 = vmatpush2.msra.mxu0 0.0
    %338 = vmatprep.subr.mxu0 0.0
    %339 = vmatpush2.msra.mxu0 0.0
    %340 = vmatprep.subr.mxu0 0.0
    %341 = vmatpush2.msra.mxu0 0.0
    %342 = vmatprep.subr.mxu0 0.0
    %343 = vmatpush2.msra.mxu0 0.0
    %344 = vmatprep.subr.mxu0 0.0
    %345 = vmatpush2.msra.mxu0 0.0
    %346 = vmatprep.mubr.f32.mxu0 0.0
    %v347 = vand.u32 %v54, 4294901760
    %v348 = vsub.f32 %v54, %v347
    %349 = vmatmul.mubr.f32.gmra.mxu0 %v348
    %v350 = vpop.f32.mrf.mxu0
    %v351 = vadd.f32 %v259, %v350
    %v352 = vpop.f32.mrf.mxu0
    %353 = vdwg.mxu0
    %354 = vmatprep.subr.mxu0 0.0
    %355 = vmatpush1.msra.mxu0 0.0
    %356 = vmatprep.subr.mxu0 0.0
    %357 = vmatpush1.msra.mxu0 0.0
    %358 = vmatprep.subr.mxu0 0.0
    %359 = vmatpush1.msra.mxu0 0.0
    %360 = vmatprep.subr.mxu0 0.0
    %361 = vmatpush1.msra.mxu0 0.0
    %362 = vmatprep.subr.mxu0 0.0
    %363 = vmatpush1.msra.mxu0 0.0
    %364 = vmatprep.subr.mxu0 0.0
    %365 = vmatpush1.msra.mxu0 0.0
    %366 = vmatprep.subr.mxu0 0.0
    %v367 = vand.u32 %v51, 4294901760
    %368 = vmatpush1.msra.mxu0 %v367
    %369 = vmatprep.subr.mxu0 0.0
    %v370 = vand.u32 %v50, 4294901760
    %371 = vmatpush1.msra.mxu0 %v370
    %372 = vmatprep.subr.mxu0 0.0
    %v373 = vand.u32 %v49, 4294901760
    %374 = vmatpush1.msra.mxu0 %v373
    %375 = vmatprep.subr.mxu0 0.0
    %v376 = vand.u32 %v48, 4294901760
    %377 = vmatpush1.msra.mxu0 %v376
    %378 = vmatprep.subr.mxu0 0.0
    %v379 = vand.u32 %v47, 4294901760
    %380 = vmatpush1.msra.mxu0 %v379
    %381 = vmatprep.subr.mxu0 0.0
    %v382 = vand.u32 %v46, 4294901760
    %383 = vmatpush1.msra.mxu0 %v382
    %384 = vmatprep.subr.mxu0 0.0
    %v385 = vand.u32 %v45, 4294901760
    %386 = vmatpush1.msra.mxu0 %v385
    %387 = vmatprep.subr.mxu0 0.0
    %v388 = vand.u32 %v44, 4294901760
    %389 = vmatpush1.msra.mxu0 %v388
    %390 = vmatprep.subr.mxu0 0.0
    %v391 = vand.u32 %v43, 4294901760
    %392 = vmatpush1.msra.mxu0 %v391
    %393 = vmatprep.subr.mxu0 0.0
    %v394 = vand.u32 %v42, 4294901760
    %395 = vmatpush1.msra.mxu0 %v394
    %396 = vmatprep.subr.mxu0 0.0
    %397 = vmatpush2.msra.mxu0 0.0
    %398 = vmatprep.subr.mxu0 0.0
    %399 = vmatpush2.msra.mxu0 0.0
    %400 = vmatprep.subr.mxu0 0.0
    %401 = vmatpush2.msra.mxu0 0.0
    %402 = vmatprep.subr.mxu0 0.0
    %403 = vmatpush2.msra.mxu0 0.0
    %404 = vmatprep.subr.mxu0 0.0
    %405 = vmatpush2.msra.mxu0 0.0
    %406 = vmatprep.subr.mxu0 0.0
    %407 = vmatpush2.msra.mxu0 0.0
    %408 = vmatprep.subr.mxu0 0.0
    %409 = vmatpush2.msra.mxu0 0.0
    %410 = vmatprep.subr.mxu0 0.0
    %411 = vmatpush2.msra.mxu0 0.0
    %412 = vmatprep.subr.mxu0 0.0
    %413 = vmatpush2.msra.mxu0 0.0
    %414 = vmatprep.subr.mxu0 0.0
    %415 = vmatpush2.msra.mxu0 0.0
    %416 = vmatprep.subr.mxu0 0.0
    %417 = vmatpush2.msra.mxu0 0.0
    %418 = vmatprep.subr.mxu0 0.0
    %419 = vmatpush2.msra.mxu0 0.0
    %420 = vmatprep.subr.mxu0 0.0
    %421 = vmatpush2.msra.mxu0 0.0
    %422 = vmatprep.subr.mxu0 0.0
    %423 = vmatpush2.msra.mxu0 0.0
    %424 = vmatprep.subr.mxu0 0.0
    %425 = vmatpush2.msra.mxu0 0.0
    %426 = vmatprep.subr.mxu0 0.0
    %427 = vmatpush2.msra.mxu0 0.0
    %428 = vmatprep.mubr.f32.mxu0 0.0
    %v429 = vand.u32 %v54, 4294901760
    %v430 = vsub.f32 %v54, %v429
    %v431 = vand.u32 %v430, 4294901760
    %432 = vmatmul.mubr.f32.gmra.mxu0 %v431
    %v433 = vpop.f32.mrf.mxu0
    %v434 = vadd.f32 %v351, %v433
    %v435 = vpop.f32.mrf.mxu0
    %436 = vdwg.mxu0
    %437 = vmatprep.subr.mxu0 0.0
    %438 = vmatpush1.msra.mxu0 0.0
    %439 = vmatprep.subr.mxu0 0.0
    %440 = vmatpush1.msra.mxu0 0.0
    %441 = vmatprep.subr.mxu0 0.0
    %442 = vmatpush1.msra.mxu0 0.0
    %443 = vmatprep.subr.mxu0 0.0
    %444 = vmatpush1.msra.mxu0 0.0
    %445 = vmatprep.subr.mxu0 0.0
    %446 = vmatpush1.msra.mxu0 0.0
    %447 = vmatprep.subr.mxu0 0.0
    %448 = vmatpush1.msra.mxu0 0.0
    %449 = vmatprep.subr.mxu0 0.0
    %v450 = vand.u32 %v51, 4294901760
    %v451 = vsub.f32 %v51, %v450
    %v452 = vand.u32 %v451, 4294901760
    %453 = vmatpush1.msra.mxu0 %v452
    %454 = vmatprep.subr.mxu0 0.0
    %v455 = vand.u32 %v50, 4294901760
    %v456 = vsub.f32 %v50, %v455
    %v457 = vand.u32 %v456, 4294901760
    %458 = vmatpush1.msra.mxu0 %v457
    %459 = vmatprep.subr.mxu0 0.0
    %v460 = vand.u32 %v49, 4294901760
    %v461 = vsub.f32 %v49, %v460
    %v462 = vand.u32 %v461, 4294901760
    %463 = vmatpush1.msra.mxu0 %v462
    %464 = vmatprep.subr.mxu0 0.0
    %v465 = vand.u32 %v48, 4294901760
    %v466 = vsub.f32 %v48, %v465
    %v467 = vand.u32 %v466, 4294901760
    %468 = vmatpush1.msra.mxu0 %v467
    %469 = vmatprep.subr.mxu0 0.0
    %v470 = vand.u32 %v47, 4294901760
    %v471 = vsub.f32 %v47, %v470
    %v472 = vand.u32 %v471, 4294901760
    %473 = vmatpush1.msra.mxu0 %v472
    %474 = vmatprep.subr.mxu0 0.0
    %v475 = vand.u32 %v46, 4294901760
    %v476 = vsub.f32 %v46, %v475
    %v477 = vand.u32 %v476, 4294901760
    %478 = vmatpush1.msra.mxu0 %v477
    %479 = vmatprep.subr.mxu0 0.0
    %v480 = vand.u32 %v45, 4294901760
    %v481 = vsub.f32 %v45, %v480
    %v482 = vand.u32 %v481, 4294901760
    %483 = vmatpush1.msra.mxu0 %v482
    %484 = vmatprep.subr.mxu0 0.0
    %v485 = vand.u32 %v44, 4294901760
    %v486 = vsub.f32 %v44, %v485
    %v487 = vand.u32 %v486, 4294901760
    %488 = vmatpush1.msra.mxu0 %v487
    %489 = vmatprep.subr.mxu0 0.0
    %v490 = vand.u32 %v43, 4294901760
    %v491 = vsub.f32 %v43, %v490
    %v492 = vand.u32 %v491, 4294901760
    %493 = vmatpush1.msra.mxu0 %v492
    %494 = vmatprep.subr.mxu0 0.0
    %v495 = vand.u32 %v42, 4294901760
    %v496 = vsub.f32 %v42, %v495
    %v497 = vand.u32 %v496, 4294901760
    %498 = vmatpush1.msra.mxu0 %v497
    %499 = vmatprep.subr.mxu0 0.0
    %500 = vmatpush2.msra.mxu0 0.0
    %501 = vmatprep.subr.mxu0 0.0
    %502 = vmatpush2.msra.mxu0 0.0
    %503 = vmatprep.subr.mxu0 0.0
    %504 = vmatpush2.msra.mxu0 0.0
    %505 = vmatprep.subr.mxu0 0.0
    %506 = vmatpush2.msra.mxu0 0.0
    %507 = vmatprep.subr.mxu0 0.0
    %508 = vmatpush2.msra.mxu0 0.0
    %509 = vmatprep.subr.mxu0 0.0
    %510 = vmatpush2.msra.mxu0 0.0
    %511 = vmatprep.subr.mxu0 0.0
    %512 = vmatpush2.msra.mxu0 0.0
    %513 = vmatprep.subr.mxu0 0.0
    %514 = vmatpush2.msra.mxu0 0.0
    %515 = vmatprep.subr.mxu0 0.0
    %516 = vmatpush2.msra.mxu0 0.0
    %517 = vmatprep.subr.mxu0 0.0
    %518 = vmatpush2.msra.mxu0 0.0
    %519 = vmatprep.subr.mxu0 0.0
    %520 = vmatpush2.msra.mxu0 0.0
    %521 = vmatprep.subr.mxu0 0.0
    %522 = vmatpush2.msra.mxu0 0.0
    %523 = vmatprep.subr.mxu0 0.0
    %524 = vmatpush2.msra.mxu0 0.0
    %525 = vmatprep.subr.mxu0 0.0
    %526 = vmatpush2.msra.mxu0 0.0
    %527 = vmatprep.subr.mxu0 0.0
    %528 = vmatpush2.msra.mxu0 0.0
    %529 = vmatprep.subr.mxu0 0.0
    %530 = vmatpush2.msra.mxu0 0.0
    %531 = vmatprep.mubr.f32.mxu0 0.0
    %v532 = vand.u32 %v54, 4294901760
    %533 = vmatmul.mubr.f32.gmra.mxu0 %v532
    %v534 = vpop.f32.mrf.mxu0
    %v535 = vadd.f32 %v434, %v534
    %v536 = vpop.f32.mrf.mxu0
    %537 = vdwg.mxu0
    %538 = vmatprep.subr.mxu0 0.0
    %539 = vmatpush1.msra.mxu0 0.0
    %540 = vmatprep.subr.mxu0 0.0
    %541 = vmatpush1.msra.mxu0 0.0
    %542 = vmatprep.subr.mxu0 0.0
    %543 = vmatpush1.msra.mxu0 0.0
    %544 = vmatprep.subr.mxu0 0.0
    %545 = vmatpush1.msra.mxu0 0.0
    %546 = vmatprep.subr.mxu0 0.0
    %547 = vmatpush1.msra.mxu0 0.0
    %548 = vmatprep.subr.mxu0 0.0
    %549 = vmatpush1.msra.mxu0 0.0
    %550 = vmatprep.subr.mxu0 0.0
    %v551 = vand.u32 %v51, 4294901760
    %552 = vmatpush1.msra.mxu0 %v551
    %553 = vmatprep.subr.mxu0 0.0
    %v554 = vand.u32 %v50, 4294901760
    %555 = vmatpush1.msra.mxu0 %v554
    %556 = vmatprep.subr.mxu0 0.0
    %v557 = vand.u32 %v49, 4294901760
    %558 = vmatpush1.msra.mxu0 %v557
    %559 = vmatprep.subr.mxu0 0.0
    %v560 = vand.u32 %v48, 4294901760
    %561 = vmatpush1.msra.mxu0 %v560
    %562 = vmatprep.subr.mxu0 0.0
    %v563 = vand.u32 %v47, 4294901760
    %564 = vmatpush1.msra.mxu0 %v563
    %565 = vmatprep.subr.mxu0 0.0
    %v566 = vand.u32 %v46, 4294901760
    %567 = vmatpush1.msra.mxu0 %v566
    %568 = vmatprep.subr.mxu0 0.0
    %v569 = vand.u32 %v45, 4294901760
    %570 = vmatpush1.msra.mxu0 %v569
    %571 = vmatprep.subr.mxu0 0.0
    %v572 = vand.u32 %v44, 4294901760
    %573 = vmatpush1.msra.mxu0 %v572
    %574 = vmatprep.subr.mxu0 0.0
    %v575 = vand.u32 %v43, 4294901760
    %576 = vmatpush1.msra.mxu0 %v575
    %577 = vmatprep.subr.mxu0 0.0
    %v578 = vand.u32 %v42, 4294901760
    %579 = vmatpush1.msra.mxu0 %v578
    %580 = vmatprep.subr.mxu0 0.0
    %581 = vmatpush2.msra.mxu0 0.0
    %582 = vmatprep.subr.mxu0 0.0
    %583 = vmatpush2.msra.mxu0 0.0
    %584 = vmatprep.subr.mxu0 0.0
    %585 = vmatpush2.msra.mxu0 0.0
    %586 = vmatprep.subr.mxu0 0.0
    %587 = vmatpush2.msra.mxu0 0.0
    %588 = vmatprep.subr.mxu0 0.0
    %589 = vmatpush2.msra.mxu0 0.0
    %590 = vmatprep.subr.mxu0 0.0
    %591 = vmatpush2.msra.mxu0 0.0
    %592 = vmatprep.subr.mxu0 0.0
    %593 = vmatpush2.msra.mxu0 0.0
    %594 = vmatprep.subr.mxu0 0.0
    %595 = vmatpush2.msra.mxu0 0.0
    %596 = vmatprep.subr.mxu0 0.0
    %597 = vmatpush2.msra.mxu0 0.0
    %598 = vmatprep.subr.mxu0 0.0
    %599 = vmatpush2.msra.mxu0 0.0
    %600 = vmatprep.subr.mxu0 0.0
    %601 = vmatpush2.msra.mxu0 0.0
    %602 = vmatprep.subr.mxu0 0.0
    %603 = vmatpush2.msra.mxu0 0.0
    %604 = vmatprep.subr.mxu0 0.0
    %605 = vmatpush2.msra.mxu0 0.0
    %606 = vmatprep.subr.mxu0 0.0
    %607 = vmatpush2.msra.mxu0 0.0
    %608 = vmatprep.subr.mxu0 0.0
    %609 = vmatpush2.msra.mxu0 0.0
    %610 = vmatprep.subr.mxu0 0.0
    %611 = vmatpush2.msra.mxu0 0.0
    %612 = vmatprep.mubr.f32.mxu0 0.0
    %v613 = vand.u32 %v54, 4294901760
    %614 = vmatmul.mubr.f32.gmra.mxu0 %v613
    %v615 = vpop.f32.mrf.mxu0
    %v616 = vadd.f32 %v535, %v615
    %v617 = vpop.f32.mrf.mxu0
    %618 = vdwg.mxu0
    %s619 = smul.u32 0, 8
    %v620 = vlaneseq
    %v621 = vshrl.u32 %v620, 7
    %v622 = vstv %s619
    %v623 = vadd.s32 %v622, %v621
    %v624 = vstv %s31
    %vm625 = vcmp.lt.s32.totalorder %v623, %v624
    %v626 = vmul.f32 %v616, %v32
    %v627 = vsel %vm52, %v626, 0.0
    %628 = vadd.xlane.f32.xlu0 %v627
    %v629 = vpop.xlane.xlu0 %628
    %v630 = vsel %vm625, %v629, 1.0
    %v631 = vadd.f32 %v630, 1e-08
    %v632 = vlog2.pop %v631
    %v633 = vmul.f32 %v632, 0.6931472
    %v634 = vsub.f32 0.0, %v633
    %v635 = vsel %vm625, %v634, 0.0
    %vm636 = vcmask 7168
    %v637 = vsel %vm636, %v635, 0.0
    %638 = vadd.xlane.f32.xlu0 %v637
    %v639 = vpop.xlane.xlu0 %638
    %v640 = vrot.slane %v639, 4
    %v641 = vadd.f32 %v639, %v640
    %v642 = vrot.slane %v641, 2
    %v643 = vadd.f32 %v641, %v642
    %v644 = vrot.slane %v643, 1
    %v645 = vadd.f32 %v643, %v644
    %s646 = vtos %v645
    %vm647 = vcmp.eq.s32.totalorder %v621, 0
    %vm648 = vcmp.eq.s32.totalorder %v35, 0
    %vm649 = vmand %vm647, %vm648
    %v650 = vstv %s646
    %v651 = vsel %vm649, %v650, 0.0
    %652 = vst [vmem:[#allocation7] sm:$0xff] %v651
    // Predicated region
    $region18: #{tpu_custom_call.1} parent=1 // pred_check
      _
    $region19: #{tpu_custom_call.1} parent=1 // pred_check_branch
      %654 = sbr.rel (0) target = $region21
    $region20: #{tpu_custom_call.1} parent=1 // pred_region
      %s656 = ssub.s32 128, 128
      %657 = vsyncadd [#allocation6], %s656
      %s659 = sshll.u32 [#allocation7], 4
      %s660 = int_to_ptr.vmem [resolvable:$true] %s659
      %662 = dma.vmem_to_hbm [thread:$0]  %s660, 128, %s4, [#allocation6]
    $region21: #{tpu_custom_call.1} parent=1 // pred_fallthru
      _
    // Predicated region
    $region22: #{tpu_custom_call.1} parent=1 // pred_check
      _
    $region23: #{tpu_custom_call.1} parent=1 // pred_check_branch
      %664 = sbr.rel (0) target = $region25
    $region24: #{tpu_custom_call.1} parent=1 // pred_region
      %665 = dma.done [#allocation6], 128
    $region25: #{tpu_custom_call.1} parent=1 // pred_fallthru
      _
    %666 = vsyncpa [#allocation5], 1
    %667 = vsyncpa [#allocation6], 1

</llo_original>
